<compile_context>
chip_gen: v5e
topology: v5e:2x2
jax: 0.10.0
libtpu: 0.0.40
codegen_flags: <defaults>
</compile_context>

<pallas_src>
import numpy as np
import jax
import jax.numpy as jnp
from jax.experimental import pallas as pl
from jax.experimental.pallas import tpu as pltpu


def _cal_freq_list(frequency_num, max_radius, min_radius):
    # 'geometric' init (deterministic), matching the PyTorch module default.
    log_timescale_increment = np.log(float(max_radius) / float(min_radius)) / (
        frequency_num * 1.0 - 1
    )
    timescales = min_radius * np.exp(
        np.arange(frequency_num).astype(float) * log_timescale_increment
    )
    return 1.0 / timescales


def _theory_kernel(xy_ref, const_ref, o_ref):
    # xy_ref: (tm, 2); const_ref: (3, D) rows = [coef_x*f, coef_y*f, phase_off];
    # o_ref: (tm, D)
    x = xy_ref[:, 0:1]                 # (tm, 1)
    y = xy_ref[:, 1:2]                 # (tm, 1)
    cxf = const_ref[0:1, :]            # (1, D)
    cyf = const_ref[1:2, :]            # (1, D)
    off = const_ref[2:3, :]            # (1, D)
    # Projection onto the three unit vectors with the frequency already folded
    # into the per-lane coefficients, plus the per-lane sin/cos phase offset.
    phase = x * cxf + y * cyf + off
    # cos(x) == sin(x + pi/2): a single EUP/VPU sin pass covers even (sin) and
    # odd (cos) lanes.  (f32 pi/2 adds ~1 ulp phase error on odd lanes;
    # negligible at |phase| within the module's radius range.)
    o_ref[...] = jnp.sin(phase)


# Tiling policy (see review): big blocks for the mem-bound regime, but keep
# enough grid steps for v7x's two TensorCores to stay balanced and pipelined.
_TM_MAX = 8192        # max rows per grid step
_TM_MIN = 512         # don't shrink below this; per-step overhead ~0.35 us
_MIN_GRID_STEPS = 8   # ~4 steps per TensorCore on v7x (2 TCs share the grid)


def _pick_row_tile(M):
    if M <= _TM_MIN:
        # Single full-extent block (always a legal block shape).
        return M
    target = pl.cdiv(M, _MIN_GRID_STEPS)
    tm = max(_TM_MIN, min(_TM_MAX, target))
    tm = ((tm + 7) // 8) * 8           # sublane-aligned (multiple of 8)
    return tm


def theory_grid_cell_encode(
    coords, frequency_num=16, max_radius=10000, min_radius=1000
):
    """coords: (B, N, 2) array -> (B, N, 6*frequency_num) float32."""
    B, N, C = coords.shape
    assert C == 2, "coord_dim must be 2"
    D = 6 * frequency_num

    # ---- deterministic parameter setup (plain numpy glue, float64) ----
    freq_list = _cal_freq_list(frequency_num, max_radius, min_radius)
    unit_vecs = np.array(
        [[1.0, 0.0], [-0.5, np.sqrt(3.0) / 2.0], [-0.5, -np.sqrt(3.0) / 2.0]]
    )
    k = np.arange(D)
    j = k % 6                               # position within a group of 6
    freq_vec = freq_list[k // 6]            # frequency for this lane
    coef_x = unit_vecs[j // 2, 0] * freq_vec    # freq folded into coefficient
    coef_y = unit_vecs[j // 2, 1] * freq_vec
    phase_off = np.where(k % 2 == 0, 0.0, np.pi / 2.0)   # even->sin, odd->cos
    consts = jnp.asarray(
        np.stack([coef_x, coef_y, phase_off], axis=0), jnp.float32
    )  # (3, D): one constant input instead of three

    # ---- flatten the point axis; no padding, no post-kernel slice ----
    M = B * N
    xy = jnp.reshape(jnp.asarray(coords, jnp.float32), (M, 2))
    tm = _pick_row_tile(M)
    grid = (pl.cdiv(M, tm),)

    # VMEM budget: xy block (tm, 2) lane-pads to (tm, 128); out block (tm, D);
    # both double-buffered.  Explicit limit so tm=8192 clears v5e's 16 MiB
    # default scoped limit while staying well under v7x's 64 MiB physical VMEM.
    xy_block_bytes = tm * 128 * 4
    out_block_bytes = tm * D * 4
    vmem_limit = 2 * (xy_block_bytes + out_block_bytes) + (2 << 20)
    vmem_limit = int(min(max(vmem_limit, 16 << 20), 48 << 20))

    # Note: D = 6*frequency_num (96 by default) is < 128, so output stores are
    # masked vst with ~75% lane utilization; the HBM DMA is still contiguous.
    out = pl.pallas_call(
        _theory_kernel,
        out_shape=jax.ShapeDtypeStruct((M, D), jnp.float32),
        grid_spec=pltpu.PrefetchScalarGridSpec(
            num_scalar_prefetch=0,
            grid=grid,
            in_specs=[
                pl.BlockSpec((tm, 2), lambda i: (i, 0)),
                pl.BlockSpec((3, D), lambda i: (0, 0)),
            ],
            out_specs=pl.BlockSpec((tm, D), lambda i: (i, 0)),
        ),
        compiler_params=pltpu.CompilerParams(
            dimension_semantics=("parallel",),
            vmem_limit_bytes=vmem_limit,
        ),
        cost_estimate=pl.CostEstimate(
            flops=4 * M * D,              # 2 mul + 2 add per output element
            transcendentals=M * D,        # one sin per output element
            bytes_accessed=4 * M * D + 8 * M + 3 * 4 * D,
        ),
    )(xy, consts)

    return out.reshape(B, N, D)


def _reference_encode(coords_np, frequency_num, max_radius, min_radius):
    """Numpy port of the PyTorch module's make_input_embeds (for checking)."""
    freq_list = _cal_freq_list(frequency_num, max_radius, min_radius)
    freq_mat = np.repeat(np.expand_dims(freq_list, axis=1), 6, axis=1)
    u1 = np.array([1.0, 0.0])
    u2 = np.array([-0.5, np.sqrt(3.0) / 2.0])
    u3 = np.array([-0.5, -np.sqrt(3.0) / 2.0])
    coords_np = coords_np.astype(float)
    a1 = np.expand_dims(coords_np @ u1, axis=-1)
    a2 = np.expand_dims(coords_np @ u2, axis=-1)
    a3 = np.expand_dims(coords_np @ u3, axis=-1)
    angle = np.concatenate([a1, a1, a2, a2, a3, a3], axis=-1)
    angle = np.expand_dims(angle, axis=-2)
    angle = np.repeat(angle, frequency_num, axis=-2) * freq_mat
    spr = np.reshape(angle, (coords_np.shape[0], coords_np.shape[1], -1))
    spr[:, :, 0::2] = np.sin(spr[:, :, 0::2])
    spr[:, :, 1::2] = np.cos(spr[:, :, 1::2])
    return spr.astype(np.float32)


if __name__ == "__main__":
    # small shapes: batch=2, num_context_pt=8, coord_dim=2, frequency_num=16
    B, N, F = 2, 8, 16
    key = jax.random.PRNGKey(0)
    coords = jax.random.uniform(
        key, (B, N, 2), dtype=jnp.float32, minval=-500.0, maxval=500.0
    )

    out = theory_grid_cell_encode(
        coords, frequency_num=F, max_radius=10000, min_radius=1000
    )
    out = jax.block_until_ready(out)

    ref = _reference_encode(np.asarray(coords), F, 10000, 1000)
    assert out.shape == (B, N, 6 * F), out.shape
    np.testing.assert_allclose(np.asarray(out), ref, rtol=1e-5, atol=1e-5)

    # Secondary check: multi-step grid with a ragged tail block (M = 1200 ->
    # tm = 512, 3 grid steps, last block clipped on writeback).
    B2, N2 = 2, 600
    coords2 = jax.random.uniform(
        jax.random.PRNGKey(1), (B2, N2, 2), dtype=jnp.float32,
        minval=-500.0, maxval=500.0,
    )
    out2 = jax.block_until_ready(
        theory_grid_cell_encode(coords2, frequency_num=F,
                                max_radius=10000, min_radius=1000)
    )
    ref2 = _reference_encode(np.asarray(coords2), F, 10000, 1000)
    np.testing.assert_allclose(np.asarray(out2), ref2, rtol=1e-5, atol=1e-5)

    print("KERNEL_OK")
</pallas_src>

<mosaic_0001>
module attributes {stable_mosaic.version = 11 : i64} {
  func.func @_theory_kernel(%arg0: i32, %arg1: memref<16x2xf32, #tpu.memory_space<vmem>>, %arg2: memref<3x96xf32, #tpu.memory_space<vmem>>, %arg3: memref<16x96xf32, #tpu.memory_space<vmem>>) attributes {dimension_semantics = [#tpu.dimension_semantics<parallel>], iteration_bounds = array<i64: 1>, scalar_prefetch = 0 : i64, scratch_operands = 0 : i64, tpu.core_type = #tpu.core_type<tc>, window_params = [{transform_indices = @transform_0, window_bounds = array<i64: 16, 2>}, {pipeline_mode = #tpu.pipeline_mode<synchronous>, transform_indices = @transform_1, window_bounds = array<i64: 3, 96>}, {transform_indices = @transform_2, window_bounds = array<i64: 16, 96>}]} {
    %c0 = arith.constant 0 : index
    %c0_0 = arith.constant 0 : index
    %0 = vector.load %arg1[%c0, %c0_0] : memref<16x2xf32, #tpu.memory_space<vmem>>, vector<16x1xf32>
    %c0_1 = arith.constant 0 : index
    %c1 = arith.constant 1 : index
    %1 = vector.load %arg1[%c0_1, %c1] : memref<16x2xf32, #tpu.memory_space<vmem>>, vector<16x1xf32>
    %c0_2 = arith.constant 0 : index
    %c0_3 = arith.constant 0 : index
    %2 = vector.load %arg2[%c0_2, %c0_3] : memref<3x96xf32, #tpu.memory_space<vmem>>, vector<1x96xf32>
    %c1_4 = arith.constant 1 : index
    %c0_5 = arith.constant 0 : index
    %3 = vector.load %arg2[%c1_4, %c0_5] : memref<3x96xf32, #tpu.memory_space<vmem>>, vector<1x96xf32>
    %c2 = arith.constant 2 : index
    %c0_6 = arith.constant 0 : index
    %4 = vector.load %arg2[%c2, %c0_6] : memref<3x96xf32, #tpu.memory_space<vmem>>, vector<1x96xf32>
    %5 = vector.broadcast %0 : vector<16x1xf32> to vector<16x96xf32>
    %6 = vector.broadcast %2 : vector<1x96xf32> to vector<16x96xf32>
    %7 = arith.mulf %5, %6 : vector<16x96xf32>
    %8 = vector.broadcast %1 : vector<16x1xf32> to vector<16x96xf32>
    %9 = vector.broadcast %3 : vector<1x96xf32> to vector<16x96xf32>
    %10 = arith.mulf %8, %9 : vector<16x96xf32>
    %11 = arith.addf %7, %10 : vector<16x96xf32>
    %12 = vector.broadcast %4 : vector<1x96xf32> to vector<16x96xf32>
    %13 = arith.addf %11, %12 : vector<16x96xf32>
    %14 = math.sin %13 : vector<16x96xf32>
    %c0_7 = arith.constant 0 : index
    %c0_8 = arith.constant 0 : index
    %15 = vector.load %arg3[%c0_7, %c0_8] : memref<16x96xf32, #tpu.memory_space<vmem>>, vector<16x96xf32>
    tpu.vector_store %arg3[%c0_7, %c0_8], %14 {strides = array<i32>} : memref<16x96xf32, #tpu.memory_space<vmem>>, vector<16x96xf32>,
    return
  }
  func.func @transform_0(%arg0: i32) -> (i32, i32) {
    %c0_i32 = arith.constant 0 : i32
    %c0_i32_0 = arith.constant 0 : i32
    return %arg0, %c0_i32 : i32, i32
  }
  func.func @transform_1(%arg0: i32) -> (i32, i32) {
    %c0_i32 = arith.constant 0 : i32
    %c0_i32_0 = arith.constant 0 : i32
    %c0_i32_1 = arith.constant 0 : i32
    return %c0_i32, %c0_i32_0 : i32, i32
  }
  func.func @transform_2(%arg0: i32) -> (i32, i32) {
    %c0_i32 = arith.constant 0 : i32
    %c0_i32_0 = arith.constant 0 : i32
    return %arg0, %c0_i32 : i32, i32
  }
}

</mosaic_0001>

<llo_original>
// kernel: tpu_custom_call.1
$region0: #{tpu_custom_call.1}
  #allocation0 [shape = 'u32[]', space=smem, size = 0x4, offset = 0x4, fixed_abs, tag = 'smem constant byte address 0x4 - core index']
  #allocation1 [shape = 'u32[72,128]{1,0:T(1,128)}', space=vmem, size = 0x9000, scoped, tag = 'internal scratch']
  %s0 = inlined_call_operand.vmem [shape: f32[16,2], index: 0, kind: input, shape index: {}]
  %s1 = inlined_call_operand.vmem [shape: f32[3,96], index: 1, kind: input, shape index: {}]
  %s2 = inlined_call_operand.hbm [shape: f32[16,96], index: 2, kind: output, shape index: {}]
  %s3 = sld [smem:[#allocation0]]
  $region18: #{tpu_custom_call.1} parent=0
    _
  %s5 = ssub.s32 1, %s3
  %s6 = scalar_select 0, %s5, %s3
  $region1: #{tpu_custom_call.1} parent=0
    #allocation2 [shape = 'u8[8192]{0}', space=vmem, size = 0x2000, scoped, tag = 'output window, operand 0, single buffered']
    #allocation3 [shape = 's32[1]{0}', space=sflag, size = 0x4, scoped, tag = 'scoped memory for tpu_custom_call.1']
    %7 = vsyncpa [#allocation3], 0
    // Predicated region
    $region2: #{tpu_custom_call.1} parent=1 // pred_check
      _
    $region3: #{tpu_custom_call.1} parent=1 // pred_check_branch
      %9 = sbr.rel (0) target = $region5
    $region4: #{tpu_custom_call.1} parent=1 // pred_region
      _
    $region5: #{tpu_custom_call.1} parent=1 // pred_fallthru
      _
    // Predicated region
    $region6: #{tpu_custom_call.1} parent=1 // pred_check
      _
    $region7: #{tpu_custom_call.1} parent=1 // pred_check_branch
      %11 = sbr.rel (0) target = $region9
    $region8: #{tpu_custom_call.1} parent=1 // pred_region
      _
    $region9: #{tpu_custom_call.1} parent=1 // pred_fallthru
      _
    %v12 = vld [vmem:[%s0] sm:$0xff]
    %v13 = vld [vmem:[%s0 + $0x8] sm:$0xff]
    %v14 = vld [vmem:[%s1] sm:$0x1]
    %v15 = vld [vmem:[%s1 + $0x1] sm:$0x1]
    %v16 = vld [vmem:[%s1 + $0x2] sm:$0x1]
    %18 = vset.pattern.permute.xlu0 0
    %19 = vperm.xlu0 %18, %v12
    %v20 = vpop.permute.xlu0 %19
    %23 = vset.pattern.permute.xlu0 0
    %24 = vperm.xlu0 %23, %v13
    %v25 = vpop.permute.xlu0 %24
    %v27 = vperm.slane %v14, 0
    %v28 = vmul.f32 %v20, %v27
    %v29 = vmul.f32 %v25, %v27
    %30 = vset.pattern.permute.xlu0 1
    %31 = vperm.xlu0 %30, %v12
    %v32 = vpop.permute.xlu0 %31
    %34 = vset.pattern.permute.xlu0 1
    %35 = vperm.xlu0 %34, %v13
    %v36 = vpop.permute.xlu0 %35
    %v38 = vperm.slane %v15, 0
    %v39 = vmul.f32 %v32, %v38
    %v40 = vmul.f32 %v36, %v38
    %v41 = vadd.f32 %v28, %v39
    %v42 = vadd.f32 %v29, %v40
    %v43 = vperm.slane %v16, 0
    %v44 = vadd.f32 %v41, %v43
    %v45 = vadd.f32 %v42, %v43
    %v46 = vand.u32 2147483647, %v44
    %vm47 = vcmp.le.f32.partialorder %v46, 0.7853982
    %vm48 = vcmp.lt.s32.totalorder %v44, 0
    %v49 = vand.u32 %v44, 2139095040
    %v50 = vshrl.u32 %v49, 23
    %v51 = vsub.s32 %v50, 127
    %v52 = vand.u32 2147483647, %v44
    %v53 = vand.u32 %v52, 8388607
    %v54 = vor.u32 %v53, 8388608
    %v55 = vsub.s32 0, %v54
    %v56 = vadd.s32 %v51, 1
    %vm57 = vcmp.gt.s32.totalorder %v56, 0
    %v58 = vsel %vm57, %v56, 0
    %v59 = vshrl.u32 %v58, 5
    %v60 = vand.u32 %v58, 31
    %v61 = vsub.s32 32, %v60
    %v62 = vshrl.u32 683565275, %v61
    %v63 = vshll.u32 683565275, %v60
    %v64 = vshrl.u32 2475754826, %v61
    %v65 = vor.u32 %v63, %v64
    %v66 = vshll.u32 2475754826, %v60
    %v67 = vshrl.u32 2131351028, %v61
    %v68 = vor.u32 %v66, %v67
    %v69 = vshll.u32 2131351028, %v60
    %v70 = vshrl.u32 2102212464, %v61
    %v71 = vor.u32 %v69, %v70
    %v72 = vshll.u32 2102212464, %v60
    %v73 = vshrl.u32 920167782, %v61
    %v74 = vor.u32 %v72, %v73
    %v75 = vshll.u32 920167782, %v60
    %v76 = vshrl.u32 1326507024, %v61
    %v77 = vor.u32 %v75, %v76
    %vm78 = vcmp.lt.s32.totalorder %v59, 1
    %vm79 = vcmp.lt.s32.totalorder %v59, 2
    %vm80 = vcmp.lt.s32.totalorder %v59, 3
    %vm81 = vcmp.lt.s32.totalorder %v59, 4
    %v82 = vsel %vm78, %v62, %v65
    %v83 = vsel %vm81, %v71, 2102212464
    %v84 = vsel %vm80, %v68, %v83
    %v85 = vsel %vm79, %v82, %v84
    %v86 = vsel %vm78, %v65, %v68
    %v87 = vsel %vm81, %v74, 920167782
    %v88 = vsel %vm80, %v71, %v87
    %v89 = vsel %vm79, %v86, %v88
    %v90 = vsel %vm78, %v68, %v71
    %v91 = vsel %vm81, %v77, 1326507024
    %v92 = vsel %vm80, %v74, %v91
    %v93 = vsel %vm79, %v90, %v92
    %v94 = vshll.u32 %v54, 8
    %v95 = vand.u32 %v94, 65535
    %v96 = vshrl.u32 %v94, 16
    %v97 = vand.u32 %v93, 65535
    %v98 = vshrl.u32 %v93, 16
    %v99 = vmul.u32 %v95, %v97
    %v100 = vmul.u32 %v95, %v98
    %v101 = vmul.u32 %v96, %v97
    %v102 = vmul.u32 %v96, %v98
    %v103 = vshll.u32 %v100, 16
    %v104 = vshrl.u32 %v100, 16
    %v105 = vshll.u32 %v101, 16
    %v106 = vshrl.u32 %v101, 16
    %vm107 = vc.u32 %v99, %v103
    %v108 = vsel %vm107, 1, 0
    %v109 = vadd.s32 %v99, %v103
    %v110 = vadd.s32 %v102, %v108
    %vm111 = vc.u32 %v109, %v105
    %v112 = vsel %vm111, 1, 0
    %v113 = vadd.s32 %v109, %v105
    %v114 = vadd.s32 %v110, %v112
    %v115 = vadd.s32 %v114, %v104
    %v116 = vadd.s32 %v115, %v106
    %v117 = vand.u32 %v94, 65535
    %v118 = vshrl.u32 %v94, 16
    %v119 = vand.u32 %v89, 65535
    %v120 = vshrl.u32 %v89, 16
    %v121 = vmul.u32 %v117, %v119
    %v122 = vmul.u32 %v117, %v120
    %v123 = vmul.u32 %v118, %v119
    %v124 = vmul.u32 %v118, %v120
    %v125 = vshll.u32 %v122, 16
    %v126 = vshrl.u32 %v122, 16
    %v127 = vshll.u32 %v123, 16
    %v128 = vshrl.u32 %v123, 16
    %vm129 = vc.u32 %v121, %v125
    %v130 = vsel %vm129, 1, 0
    %v131 = vadd.s32 %v121, %v125
    %v132 = vadd.s32 %v124, %v130
    %vm133 = vc.u32 %v131, %v127
    %v134 = vsel %vm133, 1, 0
    %v135 = vadd.s32 %v131, %v127
    %v136 = vadd.s32 %v132, %v134
    %v137 = vadd.s32 %v136, %v126
    %v138 = vadd.s32 %v137, %v128
    %v139 = vmul.u32 %v94, %v85
    %v140 = vadd.s32 %v116, %v135
    %vm141 = vc.u32 %v116, %v135
    %v142 = vadd.s32 %v138, 1
    %v143 = vsel %vm141, %v142, %v138
    %v144 = vadd.s32 %v139, %v143
    %v145 = vadd.s32 %v144, 536870912
    %v146 = vshrl.u32 %v145, 30
    %v147 = vshll.u32 %v146, 30
    %v148 = vsub.s32 %v144, %v147
    %vm149 = vcmp.lt.s32.totalorder %v148, 0
    %v150 = vsub.s32 0, %v148
    %v151 = vsel %vm149, %v150, %v148
    %v152 = vclz %v151
    %v153 = vsub.s32 %v152, 2
    %vm154 = vcmp.gt.s32.totalorder 0, %v153
    %v155 = vsel %vm154, 0, %v153
    %v156 = vsub.s32 32, %v155
    %v157 = vshll.u32 %v148, %v155
    %v158 = vshrl.u32 %v140, %v156
    %v159 = vor.u32 %v157, %v158
    %v160 = vsub.s32 4294967266, %v155
    %v161 = vadd.s32 %v160, 127
    %v162 = vshll.u32 %v161, 23
    %v163 = vor.u32 4788187, %v162
    %v164 = vand.u32 2147483647, %v163
    %v166 = vcvt.s32.f32 %v159
    %v167 = vmul.f32 %v166, %v164
    %v168 = vxor.u32 %v167, 2147483648
    %v169 = vsel %vm48, %v168, %v167
    %v170 = vsub.s32 4, %v146
    %v171 = vsel %vm48, %v170, %v146
    %v172 = vsel %vm47, %v44, %v169
    %v173 = vsel %vm47, 0, %v171
    %v174 = vmul.f32 %v172, %v172
    %v175 = vmul.f32 %v174, -0.001358992
    %v176 = vadd.f32 %v175, 0.041655596
    %v177 = vmul.f32 %v174, %v176
    %v178 = vadd.f32 %v177, -0.4999988
    %v179 = vmul.f32 %v174, %v178
    %v180 = vadd.f32 1.0, %v179
    %v181 = vmul.f32 %v172, %v172
    %v182 = vmul.f32 %v181, -0.00019511016
    %v183 = vadd.f32 %v182, 0.008332121
    %v184 = vmul.f32 %v181, %v183
    %v185 = vadd.f32 %v184, -0.16666654
    %v186 = vmul.f32 %v181, %v185
    %v187 = vadd.f32 %v186, 1.0
    %v188 = vmul.f32 %v187, %v172
    %vm189 = vweird.f32 %v44
    %v190 = vadd.s32 %v173, 3
    %v191 = vand.u32 %v190, 3
    %vm192 = vcmp.lt.s32.totalorder %v191, 2
    %vm193 = vcmp.eq.s32.totalorder %v191, 0
    %v194 = vxor.u32 %v188, 2147483648
    %v195 = vsel %vm193, %v180, %v194
    %vm196 = vcmp.eq.s32.totalorder %v191, 2
    %v197 = vxor.u32 %v180, 2147483648
    %v198 = vsel %vm196, %v197, %v188
    %v199 = vsel %vm192, %v195, %v198
    %v200 = vsel %vm189, nan, %v199
    %v201 = vand.u32 2147483647, %v45
    %vm202 = vcmp.le.f32.partialorder %v201, 0.7853982
    %vm203 = vcmp.lt.s32.totalorder %v45, 0
    %v204 = vand.u32 %v45, 2139095040
    %v205 = vshrl.u32 %v204, 23
    %v206 = vsub.s32 %v205, 127
    %v207 = vand.u32 2147483647, %v45
    %v208 = vand.u32 %v207, 8388607
    %v209 = vor.u32 %v208, 8388608
    %v210 = vsub.s32 0, %v209
    %v211 = vadd.s32 %v206, 1
    %vm212 = vcmp.gt.s32.totalorder %v211, 0
    %v213 = vsel %vm212, %v211, 0
    %v214 = vshrl.u32 %v213, 5
    %v215 = vand.u32 %v213, 31
    %v216 = vsub.s32 32, %v215
    %v217 = vshrl.u32 683565275, %v216
    %v218 = vshll.u32 683565275, %v215
    %v219 = vshrl.u32 2475754826, %v216
    %v220 = vor.u32 %v218, %v219
    %v221 = vshll.u32 2475754826, %v215
    %v222 = vshrl.u32 2131351028, %v216
    %v223 = vor.u32 %v221, %v222
    %v224 = vshll.u32 2131351028, %v215
    %v225 = vshrl.u32 2102212464, %v216
    %v226 = vor.u32 %v224, %v225
    %v227 = vshll.u32 2102212464, %v215
    %v228 = vshrl.u32 920167782, %v216
    %v229 = vor.u32 %v227, %v228
    %v230 = vshll.u32 920167782, %v215
    %v231 = vshrl.u32 1326507024, %v216
    %v232 = vor.u32 %v230, %v231
    %vm233 = vcmp.lt.s32.totalorder %v214, 1
    %vm234 = vcmp.lt.s32.totalorder %v214, 2
    %vm235 = vcmp.lt.s32.totalorder %v214, 3
    %vm236 = vcmp.lt.s32.totalorder %v214, 4
    %v237 = vsel %vm233, %v217, %v220
    %v238 = vsel %vm236, %v226, 2102212464
    %v239 = vsel %vm235, %v223, %v238
    %v240 = vsel %vm234, %v237, %v239
    %v241 = vsel %vm233, %v220, %v223
    %v242 = vsel %vm236, %v229, 920167782
    %v243 = vsel %vm235, %v226, %v242
    %v244 = vsel %vm234, %v241, %v243
    %v245 = vsel %vm233, %v223, %v226
    %v246 = vsel %vm236, %v232, 1326507024
    %v247 = vsel %vm235, %v229, %v246
    %v248 = vsel %vm234, %v245, %v247
    %v249 = vshll.u32 %v209, 8
    %v250 = vand.u32 %v249, 65535
    %v251 = vshrl.u32 %v249, 16
    %v252 = vand.u32 %v248, 65535
    %v253 = vshrl.u32 %v248, 16
    %v254 = vmul.u32 %v250, %v252
    %v255 = vmul.u32 %v250, %v253
    %v256 = vmul.u32 %v251, %v252
    %v257 = vmul.u32 %v251, %v253
    %v258 = vshll.u32 %v255, 16
    %v259 = vshrl.u32 %v255, 16
    %v260 = vshll.u32 %v256, 16
    %v261 = vshrl.u32 %v256, 16
    %vm262 = vc.u32 %v254, %v258
    %v263 = vsel %vm262, 1, 0
    %v264 = vadd.s32 %v254, %v258
    %v265 = vadd.s32 %v257, %v263
    %vm266 = vc.u32 %v264, %v260
    %v267 = vsel %vm266, 1, 0
    %v268 = vadd.s32 %v264, %v260
    %v269 = vadd.s32 %v265, %v267
    %v270 = vadd.s32 %v269, %v259
    %v271 = vadd.s32 %v270, %v261
    %v272 = vand.u32 %v249, 65535
    %v273 = vshrl.u32 %v249, 16
    %v274 = vand.u32 %v244, 65535
    %v275 = vshrl.u32 %v244, 16
    %v276 = vmul.u32 %v272, %v274
    %v277 = vmul.u32 %v272, %v275
    %v278 = vmul.u32 %v273, %v274
    %v279 = vmul.u32 %v273, %v275
    %v280 = vshll.u32 %v277, 16
    %v281 = vshrl.u32 %v277, 16
    %v282 = vshll.u32 %v278, 16
    %v283 = vshrl.u32 %v278, 16
    %vm284 = vc.u32 %v276, %v280
    %v285 = vsel %vm284, 1, 0
    %v286 = vadd.s32 %v276, %v280
    %v287 = vadd.s32 %v279, %v285
    %vm288 = vc.u32 %v286, %v282
    %v289 = vsel %vm288, 1, 0
    %v290 = vadd.s32 %v286, %v282
    %v291 = vadd.s32 %v287, %v289
    %v292 = vadd.s32 %v291, %v281
    %v293 = vadd.s32 %v292, %v283
    %v294 = vmul.u32 %v249, %v240
    %v295 = vadd.s32 %v271, %v290
    %vm296 = vc.u32 %v271, %v290
    %v297 = vadd.s32 %v293, 1
    %v298 = vsel %vm296, %v297, %v293
    %v299 = vadd.s32 %v294, %v298
    %v300 = vadd.s32 %v299, 536870912
    %v301 = vshrl.u32 %v300, 30
    %v302 = vshll.u32 %v301, 30
    %v303 = vsub.s32 %v299, %v302
    %vm304 = vcmp.lt.s32.totalorder %v303, 0
    %v305 = vsub.s32 0, %v303
    %v306 = vsel %vm304, %v305, %v303
    %v307 = vclz %v306
    %v308 = vsub.s32 %v307, 2
    %vm309 = vcmp.gt.s32.totalorder 0, %v308
    %v310 = vsel %vm309, 0, %v308
    %v311 = vsub.s32 32, %v310
    %v312 = vshll.u32 %v303, %v310
    %v313 = vshrl.u32 %v295, %v311
    %v314 = vor.u32 %v312, %v313
    %v315 = vsub.s32 4294967266, %v310
    %v316 = vadd.s32 %v315, 127
    %v317 = vshll.u32 %v316, 23
    %v318 = vor.u32 4788187, %v317
    %v319 = vand.u32 2147483647, %v318
    %v321 = vcvt.s32.f32 %v314
    %v322 = vmul.f32 %v321, %v319
    %v323 = vxor.u32 %v322, 2147483648
    %v324 = vsel %vm203, %v323, %v322
    %v325 = vsub.s32 4, %v301
    %v326 = vsel %vm203, %v325, %v301
    %v327 = vsel %vm202, %v45, %v324
    %v328 = vsel %vm202, 0, %v326
    %v329 = vmul.f32 %v327, %v327
    %v330 = vmul.f32 %v329, -0.001358992
    %v331 = vadd.f32 %v330, 0.041655596
    %v332 = vmul.f32 %v329, %v331
    %v333 = vadd.f32 %v332, -0.4999988
    %v334 = vmul.f32 %v329, %v333
    %v335 = vadd.f32 1.0, %v334
    %v336 = vmul.f32 %v327, %v327
    %v337 = vmul.f32 %v336, -0.00019511016
    %v338 = vadd.f32 %v337, 0.008332121
    %v339 = vmul.f32 %v336, %v338
    %v340 = vadd.f32 %v339, -0.16666654
    %v341 = vmul.f32 %v336, %v340
    %v342 = vadd.f32 %v341, 1.0
    %v343 = vmul.f32 %v342, %v327
    %vm344 = vweird.f32 %v45
    %v345 = vadd.s32 %v328, 3
    %v346 = vand.u32 %v345, 3
    %vm347 = vcmp.lt.s32.totalorder %v346, 2
    %vm348 = vcmp.eq.s32.totalorder %v346, 0
    %v349 = vxor.u32 %v343, 2147483648
    %v350 = vsel %vm348, %v335, %v349
    %vm351 = vcmp.eq.s32.totalorder %v346, 2
    %v352 = vxor.u32 %v335, 2147483648
    %v353 = vsel %vm351, %v352, %v343
    %v354 = vsel %vm347, %v350, %v353
    %v355 = vsel %vm344, nan, %v354
    %vm356 = vcmask 785408
    %357 = vst.msk [vmem:[#allocation2] sm:$0xff] %vm356, %v200
    %358 = vst.msk [vmem:[#allocation2 + $0x8] sm:$0xff] %vm356, %v355
    // Predicated region
    $region10: #{tpu_custom_call.1} parent=1 // pred_check
      _
    $region11: #{tpu_custom_call.1} parent=1 // pred_check_branch
      %360 = sbr.rel (0) target = $region13
    $region12: #{tpu_custom_call.1} parent=1 // pred_region
      %362 = vsyncadd [#allocation3], 0
      %s363 = sshll.u32 [#allocation2], 4
      %s364 = int_to_ptr.vmem [resolvable:$true] %s363
      %s365 = sshll.u32 %s2, 4
      %s366 = int_to_ptr.hbm [resolvable:$true] %s365
      %371 = dma.vmem_to_hbm [thread:$0]  %s364, 256, %s366, [#allocation3], 128, 128, 8
    $region13: #{tpu_custom_call.1} parent=1 // pred_fallthru
      _
    // Predicated region
    $region14: #{tpu_custom_call.1} parent=1 // pred_check
      _
    $region15: #{tpu_custom_call.1} parent=1 // pred_check_branch
      %373 = sbr.rel (0) target = $region17
    $region16: #{tpu_custom_call.1} parent=1 // pred_region
      %375 = dma.done [#allocation3], 256
    $region17: #{tpu_custom_call.1} parent=1 // pred_fallthru
      _
    %376 = vsyncpa [#allocation3], 1

</llo_original>
